<compile_context>
chip_gen: v6e
topology: v6e:2x2x1
jax: 0.10.0
libtpu: 0.0.40
codegen_flags: <defaults>
</compile_context>

<pallas_src>
import functools

import jax
import jax.numpy as jnp
import numpy as np
from jax.experimental import pallas as pl
from jax.experimental.pallas import tpu as pltpu

# ---- hyperparameters of the original module (FLAGS) --------------------------
N_CHARAC = 2                       # number of characters
N_OUTPUT_SYMBOLS = N_CHARAC        # output layer size (classes) == 2
N_RECALL_SYMBOL = N_CHARAC + 1     # 'recall' input symbol id == 3
TAU_OUT = 20.0
DECAY = float(np.exp(-1.0 / TAU_OUT))   # stored by __init__, unused in forward
REG_RATE_HZ = 10.0
REG_F0 = REG_RATE_HZ / 1000.0      # regularization_f0
REG_COEFF = 300.0                  # FLAGS.reg

_MAX_LANE_BLOCK = 2048             # lanes per grid step (multiple of 128)


def _round_up(x, m):
    return (x + m - 1) // m * m


def _custom_loss_kernel(za_ref, zb_ref, tgt_ref, inp_ref, fr_ref, out_ref,
                        ce_acc, nrec_acc, mse_acc, nnon_acc, *, inv_w):
    # za/zb: (W, LB) raw-time rows for class 0 / class 1, lanes = flattened (b,s)
    # tgt/inp: (1, LB) int32 (padded lanes carry inp == -1 sentinel)
    # fr: (1, R) fire rates
    i = pl.program_id(0)

    @pl.when(i == 0)
    def _init():
        ce_acc[...] = jnp.zeros_like(ce_acc)
        nrec_acc[...] = jnp.zeros_like(nrec_acc)
        mse_acc[...] = jnp.zeros_like(mse_acc)
        nnon_acc[...] = jnp.zeros_like(nnon_acc)

    # time downsample = mean over the W sublane rows (one reduce per block)
    a = jnp.sum(za_ref[...].astype(jnp.float32), axis=0, keepdims=True) * inv_w
    b = jnp.sum(zb_ref[...].astype(jnp.float32), axis=0, keepdims=True) * inv_w

    inp = inp_ref[...]
    tgt = tgt_ref[...]

    recall = (inp == N_RECALL_SYMBOL).astype(jnp.float32)   # (1, LB)
    valid = (inp >= 0).astype(jnp.float32)                  # 0 on padded lanes
    nonrec = valid - recall

    # 2-class closed forms (the module fixes n_output_symbols == 2)
    lse = jnp.maximum(a, b) + jnp.log(1.0 + jnp.exp(-jnp.abs(a - b)))
    y_t = jnp.where(tgt == 0, a, b)

    # per-lane vector accumulation; no cross-lane work in the hot path
    ce_acc[...] += recall * (lse - y_t)
    nrec_acc[...] += recall
    mse_acc[...] += nonrec * ((a - 0.5) ** 2 + (b - 0.5) ** 2)
    nnon_acc[...] += nonrec

    @pl.when(i == pl.num_programs(0) - 1)
    def _finalize():
        ce_sum = jnp.sum(ce_acc[...], keepdims=True)        # (1, 1)
        n_rec = jnp.sum(nrec_acc[...], keepdims=True)
        mse_sum = jnp.sum(mse_acc[...], keepdims=True)
        n_non = jnp.sum(nnon_acc[...], keepdims=True)

        loss_recall = ce_sum / n_rec                               # mean CE over recalls
        loss_other = mse_sum / (n_non * float(N_OUTPUT_SYMBOLS))   # mean MSE (all elems)
        loss = loss_recall + 0.01 * loss_other

        fr = fr_ref[...].astype(jnp.float32)
        loss_reg = REG_COEFF * jnp.sum((fr - REG_F0) ** 2, keepdims=True)

        # single lane-dense store of all four results
        lane = jax.lax.broadcasted_iota(jnp.int32, (1, 128), 1)
        vals = jnp.where(
            lane == 0, loss,
            jnp.where(lane == 1, loss_reg,
                      jnp.where(lane == 2, loss_recall,
                                jnp.float32(REG_COEFF))))
        out_ref[...] = vals


def custom_loss(z, target_nums, input_nums, fire_rate):
    """Pallas wrapper. Returns the same result dict as the PyTorch module."""
    B, T, N = z.shape
    Bi, S = input_nums.shape
    assert Bi == B
    assert N == N_OUTPUT_SYMBOLS == 2, "kernel specialized for 2 output symbols"
    assert T % S == 0, "time axis must be an integer multiple of seq_len"
    W = T // S

    # ---- layout plumbing only (no compute hoisted): make B*S the lane axis ----
    z4 = z.reshape(B, S, W, N).transpose(2, 0, 1, 3)       # (W, B, S, N)
    za = z4[..., 0].reshape(W, B * S)                      # class-0 logits over time
    zb = z4[..., 1].reshape(W, B * S)                      # class-1 logits over time
    tgt = target_nums.reshape(1, B * S).astype(jnp.int32)
    inp = input_nums.reshape(1, B * S).astype(jnp.int32)
    fr = fire_rate.reshape(1, -1).astype(jnp.float32)
    R = fr.shape[1]

    # pad lanes to a 128 multiple and grid over lane chunks (reduction axis)
    L0 = _round_up(B * S, 128)
    LB = min(L0, _MAX_LANE_BLOCK)
    L = _round_up(L0, LB)
    pad = L - B * S
    if pad:
        za = jnp.pad(za, ((0, 0), (0, pad)))
        zb = jnp.pad(zb, ((0, 0), (0, pad)))
        tgt = jnp.pad(tgt, ((0, 0), (0, pad)))                         # tgt=0 on pad
        inp = jnp.pad(inp, ((0, 0), (0, pad)), constant_values=-1)     # sentinel

    grid = (L // LB,)
    kernel = functools.partial(_custom_loss_kernel, inv_w=1.0 / float(W))

    out = pl.pallas_call(
        kernel,
        out_shape=jax.ShapeDtypeStruct((1, 128), jnp.float32),
        grid_spec=pltpu.PrefetchScalarGridSpec(
            num_scalar_prefetch=0,
            grid=grid,
            in_specs=[
                pl.BlockSpec((W, LB), lambda i: (0, i)),   # za
                pl.BlockSpec((W, LB), lambda i: (0, i)),   # zb
                pl.BlockSpec((1, LB), lambda i: (0, i)),   # target_nums
                pl.BlockSpec((1, LB), lambda i: (0, i)),   # input_nums
                pl.BlockSpec((1, R), lambda i: (0, 0)),    # fire_rate (tiny, resident)
            ],
            out_specs=pl.BlockSpec((1, 128), lambda i: (0, 0)),
            scratch_shapes=[pltpu.VMEM((1, LB), jnp.float32)] * 4,
        ),
        compiler_params=pltpu.CompilerParams(
            dimension_semantics=("arbitrary",)),   # accumulation axis
    )(za, zb, tgt, inp, fr)

    # TODO(synk): a v7x-specific variant could mark a leading batch axis
    # "parallel" and emit per-core partial sums combined outside the kernel to
    # use both TensorCores; kept single-reduction here for portability.
    return {
        "loss": out[0, 0],
        "loss_reg": out[0, 1],
        "loss_recall": out[0, 2],
        "regularization_coeff": out[0, 3],
    }


def _reference(z, tgt, inp, fr):
    """Pure numpy reference mirroring the PyTorch forward."""
    z = np.asarray(z, np.float32)
    tgt = np.asarray(tgt)
    inp = np.asarray(inp)
    fr = np.asarray(fr, np.float32)
    B, T, N = z.shape
    S = inp.shape[1]
    W = T // S
    out_char = z.reshape(B, S, W, N).mean(axis=2)               # torch_downsample
    mask = inp == N_RECALL_SYMBOL
    Y = out_char[mask]                                          # (n_recall, N)
    t = tgt[mask].astype(np.int64)
    m = Y.max(axis=1, keepdims=True)
    lse = (m + np.log(np.exp(Y - m).sum(axis=1, keepdims=True)))[:, 0]
    ce = float(np.mean(lse - Y[np.arange(Y.shape[0]), t]))
    non = out_char[~mask]
    mse = float(np.mean((non - 0.5) ** 2))
    loss = ce + 0.01 * mse
    loss_reg = float(REG_COEFF * np.sum((fr - REG_F0) ** 2))
    return loss, loss_reg, ce


if __name__ == "__main__":
    B, S, W = 2, 8, 4          # batch, seq_len (char steps), time steps per char
    T = S * W                  # 32 raw time steps
    N = N_OUTPUT_SYMBOLS       # 2 output neurons / classes
    R = 32                     # number of recurrent neurons (fire_rate length)

    key = jax.random.PRNGKey(0)
    k1, k2, k3, k4 = jax.random.split(key, 4)

    z = jax.random.uniform(k1, (B, T, N), dtype=jnp.float32)
    input_nums = jax.random.randint(k2, (B, S), 0, 4).astype(jnp.int32)
    # guarantee at least one recall and one non-recall step per batch element
    input_nums = input_nums.at[:, -1].set(N_RECALL_SYMBOL)
    input_nums = input_nums.at[:, 0].set(0)
    target_nums = jax.random.randint(k3, (B, S), 0, N_CHARAC).astype(jnp.int32)
    fire_rate = jax.random.uniform(k4, (1, R), dtype=jnp.float32,
                                   minval=0.0, maxval=0.05)

    results = jax.jit(custom_loss)(z, target_nums, input_nums, fire_rate)
    results = {k: jax.block_until_ready(v) for k, v in results.items()}

    ref_loss, ref_loss_reg, ref_loss_recall = _reference(z, target_nums,
                                                         input_nums, fire_rate)
    np.testing.assert_allclose(float(results["loss"]), ref_loss, rtol=1e-4, atol=1e-5)
    np.testing.assert_allclose(float(results["loss_reg"]), ref_loss_reg, rtol=1e-4, atol=1e-5)
    np.testing.assert_allclose(float(results["loss_recall"]), ref_loss_recall, rtol=1e-4, atol=1e-5)
    np.testing.assert_allclose(float(results["regularization_coeff"]), REG_COEFF, rtol=1e-6)

    print("KERNEL_OK")
</pallas_src>

<mosaic_0001>
module attributes {stable_mosaic.version = 11 : i64} {
  func.func @_custom_loss_kernel(%arg0: i32, %arg1: memref<4x128xf32, #tpu.memory_space<vmem>>, %arg2: memref<4x128xf32, #tpu.memory_space<vmem>>, %arg3: memref<1x128xi32, #tpu.memory_space<vmem>>, %arg4: memref<1x128xi32, #tpu.memory_space<vmem>>, %arg5: memref<1x32xf32, #tpu.memory_space<vmem>>, %arg6: memref<1x128xf32, #tpu.memory_space<vmem>>, %arg7: memref<1x128xf32, #tpu.memory_space<vmem>>, %arg8: memref<1x128xf32, #tpu.memory_space<vmem>>, %arg9: memref<1x128xf32, #tpu.memory_space<vmem>>, %arg10: memref<1x128xf32, #tpu.memory_space<vmem>>) attributes {dimension_semantics = [#tpu.dimension_semantics<arbitrary>], iteration_bounds = array<i64: 1>, scalar_prefetch = 0 : i64, scratch_operands = 4 : i64, tpu.core_type = #tpu.core_type<tc>, window_params = [{transform_indices = @transform_0, window_bounds = array<i64: 4, 128>}, {transform_indices = @transform_1, window_bounds = array<i64: 4, 128>}, {transform_indices = @transform_2, window_bounds = array<i64: 1, 128>}, {transform_indices = @transform_3, window_bounds = array<i64: 1, 128>}, {pipeline_mode = #tpu.pipeline_mode<synchronous>, transform_indices = @transform_4, window_bounds = array<i64: 1, 32>}, {pipeline_mode = #tpu.pipeline_mode<synchronous>, transform_indices = @transform_5, window_bounds = array<i64: 1, 128>}]} {
    %c0_i32 = arith.constant 0 : i32
    %0 = arith.cmpi eq, %arg0, %c0_i32 : i32
    %1 = arith.extui %0 : i1 to i32
    %c0_i32_0 = arith.constant 0 : i32
    %2 = arith.cmpi ne, %1, %c0_i32_0 : i32
    scf.if %2 {
      %cst_35 = arith.constant 0.000000e+00 : f32
      %62 = vector.broadcast %cst_35 : f32 to vector<1x128xf32>
      %c0_36 = arith.constant 0 : index
      %c0_37 = arith.constant 0 : index
      %63 = vector.load %arg7[%c0_36, %c0_37] : memref<1x128xf32, #tpu.memory_space<vmem>>, vector<1x128xf32>
      tpu.vector_store %arg7[%c0_36, %c0_37], %62 {strides = array<i32>} : memref<1x128xf32, #tpu.memory_space<vmem>>, vector<1x128xf32>,
      %cst_38 = arith.constant 0.000000e+00 : f32
      %64 = vector.broadcast %cst_38 : f32 to vector<1x128xf32>
      %c0_39 = arith.constant 0 : index
      %c0_40 = arith.constant 0 : index
      %65 = vector.load %arg8[%c0_39, %c0_40] : memref<1x128xf32, #tpu.memory_space<vmem>>, vector<1x128xf32>
      tpu.vector_store %arg8[%c0_39, %c0_40], %64 {strides = array<i32>} : memref<1x128xf32, #tpu.memory_space<vmem>>, vector<1x128xf32>,
      %cst_41 = arith.constant 0.000000e+00 : f32
      %66 = vector.broadcast %cst_41 : f32 to vector<1x128xf32>
      %c0_42 = arith.constant 0 : index
      %c0_43 = arith.constant 0 : index
      %67 = vector.load %arg9[%c0_42, %c0_43] : memref<1x128xf32, #tpu.memory_space<vmem>>, vector<1x128xf32>
      tpu.vector_store %arg9[%c0_42, %c0_43], %66 {strides = array<i32>} : memref<1x128xf32, #tpu.memory_space<vmem>>, vector<1x128xf32>,
      %cst_44 = arith.constant 0.000000e+00 : f32
      %68 = vector.broadcast %cst_44 : f32 to vector<1x128xf32>
      %c0_45 = arith.constant 0 : index
      %c0_46 = arith.constant 0 : index
      %69 = vector.load %arg10[%c0_45, %c0_46] : memref<1x128xf32, #tpu.memory_space<vmem>>, vector<1x128xf32>
      tpu.vector_store %arg10[%c0_45, %c0_46], %68 {strides = array<i32>} : memref<1x128xf32, #tpu.memory_space<vmem>>, vector<1x128xf32>,
    } else {
    }
    %c0 = arith.constant 0 : index
    %c0_1 = arith.constant 0 : index
    %3 = vector.load %arg1[%c0, %c0_1] : memref<4x128xf32, #tpu.memory_space<vmem>>, vector<4x128xf32>
    %cst = arith.constant dense<0.000000e+00> : vector<128xf32>
    %4 = vector.multi_reduction <add>, %3, %cst [0] : vector<4x128xf32> to vector<128xf32>
    %5 = vector.shape_cast %4 : vector<128xf32> to vector<1x128xf32>
    %cst_2 = arith.constant 2.500000e-01 : f32
    %6 = vector.broadcast %cst_2 : f32 to vector<1x128xf32>
    %7 = arith.mulf %5, %6 : vector<1x128xf32>
    %c0_3 = arith.constant 0 : index
    %c0_4 = arith.constant 0 : index
    %8 = vector.load %arg2[%c0_3, %c0_4] : memref<4x128xf32, #tpu.memory_space<vmem>>, vector<4x128xf32>
    %cst_5 = arith.constant dense<0.000000e+00> : vector<128xf32>
    %9 = vector.multi_reduction <add>, %8, %cst_5 [0] : vector<4x128xf32> to vector<128xf32>
    %10 = vector.shape_cast %9 : vector<128xf32> to vector<1x128xf32>
    %cst_6 = arith.constant 2.500000e-01 : f32
    %11 = vector.broadcast %cst_6 : f32 to vector<1x128xf32>
    %12 = arith.mulf %10, %11 : vector<1x128xf32>
    %c0_7 = arith.constant 0 : index
    %c0_8 = arith.constant 0 : index
    %13 = vector.load %arg4[%c0_7, %c0_8] : memref<1x128xi32, #tpu.memory_space<vmem>>, vector<1x128xi32>
    %c0_9 = arith.constant 0 : index
    %c0_10 = arith.constant 0 : index
    %14 = vector.load %arg3[%c0_9, %c0_10] : memref<1x128xi32, #tpu.memory_space<vmem>>, vector<1x128xi32>
    %c3_i32 = arith.constant 3 : i32
    %15 = vector.broadcast %c3_i32 : i32 to vector<1x128xi32>
    %16 = arith.cmpi eq, %13, %15 : vector<1x128xi32>
    %17 = arith.extui %16 : vector<1x128xi1> to vector<1x128xi32>
    %18 = arith.sitofp %17 : vector<1x128xi32> to vector<1x128xf32>
    %c0_i32_11 = arith.constant 0 : i32
    %19 = vector.broadcast %c0_i32_11 : i32 to vector<1x128xi32>
    %20 = arith.cmpi sge, %13, %19 : vector<1x128xi32>
    %21 = arith.extui %20 : vector<1x128xi1> to vector<1x128xi32>
    %22 = arith.sitofp %21 : vector<1x128xi32> to vector<1x128xf32>
    %23 = arith.subf %22, %18 : vector<1x128xf32>
    %24 = arith.maximumf %7, %12 : vector<1x128xf32>
    %25 = arith.subf %7, %12 : vector<1x128xf32>
    %26 = math.absf %25 : vector<1x128xf32>
    %cst_12 = arith.constant 0.000000e+00 : f32
    %27 = vector.broadcast %cst_12 : f32 to vector<1x128xf32>
    %28 = arith.subf %27, %26 : vector<1x128xf32>
    %29 = math.exp %28 : vector<1x128xf32>
    %cst_13 = arith.constant 1.000000e+00 : f32
    %30 = vector.broadcast %cst_13 : f32 to vector<1x128xf32>
    %31 = arith.addf %30, %29 : vector<1x128xf32>
    %32 = math.log %31 : vector<1x128xf32>
    %33 = arith.addf %24, %32 : vector<1x128xf32>
    %c0_i32_14 = arith.constant 0 : i32
    %34 = vector.broadcast %c0_i32_14 : i32 to vector<1x128xi32>
    %35 = arith.cmpi eq, %14, %34 : vector<1x128xi32>
    %36 = arith.select %35, %7, %12 : vector<1x128xi1>, vector<1x128xf32>
    %c0_15 = arith.constant 0 : index
    %c0_16 = arith.constant 0 : index
    %37 = vector.load %arg7[%c0_15, %c0_16] : memref<1x128xf32, #tpu.memory_space<vmem>>, vector<1x128xf32>
    %38 = arith.subf %33, %36 : vector<1x128xf32>
    %39 = arith.mulf %18, %38 : vector<1x128xf32>
    %40 = arith.addf %37, %39 : vector<1x128xf32>
    %c0_17 = arith.constant 0 : index
    %c0_18 = arith.constant 0 : index
    %41 = vector.load %arg7[%c0_17, %c0_18] : memref<1x128xf32, #tpu.memory_space<vmem>>, vector<1x128xf32>
    tpu.vector_store %arg7[%c0_17, %c0_18], %40 {strides = array<i32>} : memref<1x128xf32, #tpu.memory_space<vmem>>, vector<1x128xf32>,
    %c0_19 = arith.constant 0 : index
    %c0_20 = arith.constant 0 : index
    %42 = vector.load %arg8[%c0_19, %c0_20] : memref<1x128xf32, #tpu.memory_space<vmem>>, vector<1x128xf32>
    %43 = arith.addf %42, %18 : vector<1x128xf32>
    %c0_21 = arith.constant 0 : index
    %c0_22 = arith.constant 0 : index
    %44 = vector.load %arg8[%c0_21, %c0_22] : memref<1x128xf32, #tpu.memory_space<vmem>>, vector<1x128xf32>
    tpu.vector_store %arg8[%c0_21, %c0_22], %43 {strides = array<i32>} : memref<1x128xf32, #tpu.memory_space<vmem>>, vector<1x128xf32>,
    %c0_23 = arith.constant 0 : index
    %c0_24 = arith.constant 0 : index
    %45 = vector.load %arg9[%c0_23, %c0_24] : memref<1x128xf32, #tpu.memory_space<vmem>>, vector<1x128xf32>
    %cst_25 = arith.constant 5.000000e-01 : f32
    %46 = vector.broadcast %cst_25 : f32 to vector<1x128xf32>
    %47 = arith.subf %7, %46 : vector<1x128xf32>
    %48 = arith.mulf %47, %47 : vector<1x128xf32>
    %cst_26 = arith.constant 5.000000e-01 : f32
    %49 = vector.broadcast %cst_26 : f32 to vector<1x128xf32>
    %50 = arith.subf %12, %49 : vector<1x128xf32>
    %51 = arith.mulf %50, %50 : vector<1x128xf32>
    %52 = arith.addf %48, %51 : vector<1x128xf32>
    %53 = arith.mulf %23, %52 : vector<1x128xf32>
    %54 = arith.addf %45, %53 : vector<1x128xf32>
    %c0_27 = arith.constant 0 : index
    %c0_28 = arith.constant 0 : index
    %55 = vector.load %arg9[%c0_27, %c0_28] : memref<1x128xf32, #tpu.memory_space<vmem>>, vector<1x128xf32>
    tpu.vector_store %arg9[%c0_27, %c0_28], %54 {strides = array<i32>} : memref<1x128xf32, #tpu.memory_space<vmem>>, vector<1x128xf32>,
    %c0_29 = arith.constant 0 : index
    %c0_30 = arith.constant 0 : index
    %56 = vector.load %arg10[%c0_29, %c0_30] : memref<1x128xf32, #tpu.memory_space<vmem>>, vector<1x128xf32>
    %57 = arith.addf %56, %23 : vector<1x128xf32>
    %c0_31 = arith.constant 0 : index
    %c0_32 = arith.constant 0 : index
    %58 = vector.load %arg10[%c0_31, %c0_32] : memref<1x128xf32, #tpu.memory_space<vmem>>, vector<1x128xf32>
    tpu.vector_store %arg10[%c0_31, %c0_32], %57 {strides = array<i32>} : memref<1x128xf32, #tpu.memory_space<vmem>>, vector<1x128xf32>,
    %c0_i32_33 = arith.constant 0 : i32
    %59 = arith.cmpi eq, %arg0, %c0_i32_33 : i32
    %60 = arith.extui %59 : i1 to i32
    %c0_i32_34 = arith.constant 0 : i32
    %61 = arith.cmpi ne, %60, %c0_i32_34 : i32
    scf.if %61 {
      %c0_35 = arith.constant 0 : index
      %c0_36 = arith.constant 0 : index
      %62 = vector.load %arg7[%c0_35, %c0_36] : memref<1x128xf32, #tpu.memory_space<vmem>>, vector<1x128xf32>
      %63 = vector.shape_cast %62 : vector<1x128xf32> to vector<1x1x128xf32>
      %cst_37 = arith.constant dense<0.000000e+00> : vector<1xf32>
      %64 = vector.multi_reduction <add>, %63, %cst_37 [1, 2] : vector<1x1x128xf32> to vector<1xf32>
      %65 = vector.shape_cast %64 : vector<1xf32> to vector<1x1x1xf32>
      %66 = vector.extract %65[0, 0, 0] : f32 from vector<1x1x1xf32>
      %67 = vector.broadcast %66 : f32 to vector<1x1xf32>
      %c0_38 = arith.constant 0 : index
      %c0_39 = arith.constant 0 : index
      %68 = vector.load %arg8[%c0_38, %c0_39] : memref<1x128xf32, #tpu.memory_space<vmem>>, vector<1x128xf32>
      %69 = vector.shape_cast %68 : vector<1x128xf32> to vector<1x1x128xf32>
      %cst_40 = arith.constant dense<0.000000e+00> : vector<1xf32>
      %70 = vector.multi_reduction <add>, %69, %cst_40 [1, 2] : vector<1x1x128xf32> to vector<1xf32>
      %71 = vector.shape_cast %70 : vector<1xf32> to vector<1x1x1xf32>
      %72 = vector.extract %71[0, 0, 0] : f32 from vector<1x1x1xf32>
      %73 = vector.broadcast %72 : f32 to vector<1x1xf32>
      %c0_41 = arith.constant 0 : index
      %c0_42 = arith.constant 0 : index
      %74 = vector.load %arg9[%c0_41, %c0_42] : memref<1x128xf32, #tpu.memory_space<vmem>>, vector<1x128xf32>
      %75 = vector.shape_cast %74 : vector<1x128xf32> to vector<1x1x128xf32>
      %cst_43 = arith.constant dense<0.000000e+00> : vector<1xf32>
      %76 = vector.multi_reduction <add>, %75, %cst_43 [1, 2] : vector<1x1x128xf32> to vector<1xf32>
      %77 = vector.shape_cast %76 : vector<1xf32> to vector<1x1x1xf32>
      %78 = vector.extract %77[0, 0, 0] : f32 from vector<1x1x1xf32>
      %79 = vector.broadcast %78 : f32 to vector<1x1xf32>
      %c0_44 = arith.constant 0 : index
      %c0_45 = arith.constant 0 : index
      %80 = vector.load %arg10[%c0_44, %c0_45] : memref<1x128xf32, #tpu.memory_space<vmem>>, vector<1x128xf32>
      %81 = vector.shape_cast %80 : vector<1x128xf32> to vector<1x1x128xf32>
      %cst_46 = arith.constant dense<0.000000e+00> : vector<1xf32>
      %82 = vector.multi_reduction <add>, %81, %cst_46 [1, 2] : vector<1x1x128xf32> to vector<1xf32>
      %83 = vector.shape_cast %82 : vector<1xf32> to vector<1x1x1xf32>
      %84 = vector.extract %83[0, 0, 0] : f32 from vector<1x1x1xf32>
      %85 = vector.broadcast %84 : f32 to vector<1x1xf32>
      %86 = arith.divf %67, %73 : vector<1x1xf32>
      %cst_47 = arith.constant 2.000000e+00 : f32
      %87 = vector.broadcast %cst_47 : f32 to vector<1x1xf32>
      %88 = arith.mulf %85, %87 : vector<1x1xf32>
      %89 = arith.divf %79, %88 : vector<1x1xf32>
      %cst_48 = arith.constant 0.00999999977 : f32
      %90 = vector.broadcast %cst_48 : f32 to vector<1x1xf32>
      %91 = arith.mulf %90, %89 : vector<1x1xf32>
      %92 = arith.addf %86, %91 : vector<1x1xf32>
      %c0_49 = arith.constant 0 : index
      %c0_50 = arith.constant 0 : index
      %93 = vector.load %arg5[%c0_49, %c0_50] : memref<1x32xf32, #tpu.memory_space<vmem>>, vector<1x32xf32>
      %cst_51 = arith.constant 0.00999999977 : f32
      %94 = vector.broadcast %cst_51 : f32 to vector<1x32xf32>
      %95 = arith.subf %93, %94 : vector<1x32xf32>
      %96 = arith.mulf %95, %95 : vector<1x32xf32>
      %97 = vector.shape_cast %96 : vector<1x32xf32> to vector<1x1x32xf32>
      %cst_52 = arith.constant dense<0.000000e+00> : vector<1xf32>
      %98 = vector.multi_reduction <add>, %97, %cst_52 [1, 2] : vector<1x1x32xf32> to vector<1xf32>
      %99 = vector.shape_cast %98 : vector<1xf32> to vector<1x1x1xf32>
      %100 = vector.extract %99[0, 0, 0] : f32 from vector<1x1x1xf32>
      %101 = vector.broadcast %100 : f32 to vector<1x1xf32>
      %cst_53 = arith.constant 3.000000e+02 : f32
      %102 = vector.broadcast %cst_53 : f32 to vector<1x1xf32>
      %103 = arith.mulf %102, %101 : vector<1x1xf32>
      %104 = tpu.iota {dimensions = array<i32: 1>} : vector<1x128xi32>
      %c0_i32_54 = arith.constant 0 : i32
      %105 = vector.broadcast %c0_i32_54 : i32 to vector<1x128xi32>
      %106 = arith.cmpi eq, %104, %105 : vector<1x128xi32>
      %c1_i32 = arith.constant 1 : i32
      %107 = vector.broadcast %c1_i32 : i32 to vector<1x128xi32>
      %108 = arith.cmpi eq, %104, %107 : vector<1x128xi32>
      %c2_i32 = arith.constant 2 : i32
      %109 = vector.broadcast %c2_i32 : i32 to vector<1x128xi32>
      %110 = arith.cmpi eq, %104, %109 : vector<1x128xi32>
      %cst_55 = arith.constant 3.000000e+02 : f32
      %111 = vector.shape_cast %86 : vector<1x1xf32> to vector<1x1xf32>
      %112 = vector.broadcast %111 : vector<1x1xf32> to vector<1x128xf32>
      %113 = vector.broadcast %cst_55 : f32 to vector<1x128xf32>
      %114 = arith.select %110, %112, %113 : vector<1x128xi1>, vector<1x128xf32>
      %115 = vector.shape_cast %103 : vector<1x1xf32> to vector<1x1xf32>
      %116 = vector.broadcast %115 : vector<1x1xf32> to vector<1x128xf32>
      %117 = arith.select %108, %116, %114 : vector<1x128xi1>, vector<1x128xf32>
      %118 = vector.shape_cast %92 : vector<1x1xf32> to vector<1x1xf32>
      %119 = vector.broadcast %118 : vector<1x1xf32> to vector<1x128xf32>
      %120 = arith.select %106, %119, %117 : vector<1x128xi1>, vector<1x128xf32>
      %c0_56 = arith.constant 0 : index
      %c0_57 = arith.constant 0 : index
      %121 = vector.load %arg6[%c0_56, %c0_57] : memref<1x128xf32, #tpu.memory_space<vmem>>, vector<1x128xf32>
      tpu.vector_store %arg6[%c0_56, %c0_57], %120 {strides = array<i32>} : memref<1x128xf32, #tpu.memory_space<vmem>>, vector<1x128xf32>,
    } else {
    }
    return
  }
  func.func @transform_0(%arg0: i32) -> (i32, i32) {
    %c0_i32 = arith.constant 0 : i32
    %c0_i32_0 = arith.constant 0 : i32
    return %c0_i32, %arg0 : i32, i32
  }
  func.func @transform_1(%arg0: i32) -> (i32, i32) {
    %c0_i32 = arith.constant 0 : i32
    %c0_i32_0 = arith.constant 0 : i32
    return %c0_i32, %arg0 : i32, i32
  }
  func.func @transform_2(%arg0: i32) -> (i32, i32) {
    %c0_i32 = arith.constant 0 : i32
    %c0_i32_0 = arith.constant 0 : i32
    return %c0_i32, %arg0 : i32, i32
  }
  func.func @transform_3(%arg0: i32) -> (i32, i32) {
    %c0_i32 = arith.constant 0 : i32
    %c0_i32_0 = arith.constant 0 : i32
    return %c0_i32, %arg0 : i32, i32
  }
  func.func @transform_4(%arg0: i32) -> (i32, i32) {
    %c0_i32 = arith.constant 0 : i32
    %c0_i32_0 = arith.constant 0 : i32
    %c0_i32_1 = arith.constant 0 : i32
    return %c0_i32, %c0_i32_0 : i32, i32
  }
  func.func @transform_5(%arg0: i32) -> (i32, i32) {
    %c0_i32 = arith.constant 0 : i32
    %c0_i32_0 = arith.constant 0 : i32
    %c0_i32_1 = arith.constant 0 : i32
    return %c0_i32, %c0_i32_0 : i32, i32
  }
}

</mosaic_0001>

<llo_original>
// kernel: custom_loss.1
$region0: #{custom_loss.1}
  #allocation0 [shape = 'u32[]', space=smem, size = 0x4, offset = 0x4, fixed_abs, tag = 'smem constant byte address 0x4 - core index']
  #allocation1 [shape = 'u32[144,128]{1,0:T(1,128)}', space=vmem, size = 0x12000, scoped, tag = 'internal scratch']
  #allocation2 [shape = 'f32[1,128]{1,0:T(1,128)}', space=vmem, size = 0x200, scoped, tag = 'scratch operand']
  #allocation3 [shape = 'f32[1,128]{1,0:T(1,128)}', space=vmem, size = 0x200, scoped, tag = 'scratch operand']
  #allocation4 [shape = 'f32[1,128]{1,0:T(1,128)}', space=vmem, size = 0x200, scoped, tag = 'scratch operand']
  #allocation5 [shape = 'f32[1,128]{1,0:T(1,128)}', space=vmem, size = 0x200, scoped, tag = 'scratch operand']
  %s0 = inlined_call_operand.vmem [shape: f32[4,128], index: 0, kind: input, shape index: {}]
  %s1 = inlined_call_operand.vmem [shape: f32[4,128], index: 1, kind: input, shape index: {}]
  %s2 = inlined_call_operand.vmem [shape: s32[1,128], index: 2, kind: input, shape index: {}]
  %s3 = inlined_call_operand.vmem [shape: s32[1,128], index: 3, kind: input, shape index: {}]
  %s4 = inlined_call_operand.vmem [shape: f32[1,32], index: 4, kind: input, shape index: {}]
  %s5 = inlined_call_operand.vmem [shape: f32[1,128], index: 5, kind: output, shape index: {}]
  %s6 = sld [smem:[#allocation0]]
  $region38: #{custom_loss.1} parent=0
    _
  %s8 = ssub.s32 1, %s6
  %s9 = scalar_select 0, %s8, %s6
  // Predicated region
  $region2: #{custom_loss.1} parent=0 // pred_check
    _
  $region3: #{custom_loss.1} parent=0 // pred_check_branch
    %11 = sbr.rel (0) target = $region5
  $region4: #{custom_loss.1} parent=0 // pred_region
    _
  $region5: #{custom_loss.1} parent=0 // pred_fallthru
    _
  // Predicated region
  $region6: #{custom_loss.1} parent=0 // pred_check
    _
  $region7: #{custom_loss.1} parent=0 // pred_check_branch
    %13 = sbr.rel (0) target = $region9
  $region8: #{custom_loss.1} parent=0 // pred_region
    _
  $region9: #{custom_loss.1} parent=0 // pred_fallthru
    _
  // Predicated region
  $region10: #{custom_loss.1} parent=0 // pred_check
    _
  $region11: #{custom_loss.1} parent=0 // pred_check_branch
    %15 = sbr.rel (0) target = $region13
  $region12: #{custom_loss.1} parent=0 // pred_region
    _
  $region13: #{custom_loss.1} parent=0 // pred_fallthru
    _
  // Predicated region
  $region14: #{custom_loss.1} parent=0 // pred_check
    _
  $region15: #{custom_loss.1} parent=0 // pred_check_branch
    %17 = sbr.rel (0) target = $region17
  $region16: #{custom_loss.1} parent=0 // pred_region
    _
  $region17: #{custom_loss.1} parent=0 // pred_fallthru
    _
  // Predicated region
  $region18: #{custom_loss.1} parent=0 // pred_check
    _
  $region19: #{custom_loss.1} parent=0 // pred_check_branch
    %19 = sbr.rel (0) target = $region21
  $region20: #{custom_loss.1} parent=0 // pred_region
    _
  $region21: #{custom_loss.1} parent=0 // pred_fallthru
    _
  %p20 = scmp.eq.s32.totalorder 0, 0
  // Predicated region
  $region22: #{custom_loss.1} parent=0 // pred_check
    %p21 = pneg %p20
  $region23: #{custom_loss.1} parent=0 // pred_check_branch
    %23 = sbr.rel (%p21) target = $region25
  $region24: #{custom_loss.1} parent=0 // pred_region
    %24 = vst [vmem:[#allocation2] sm:$0x1] 0.0
    %25 = vst [vmem:[#allocation3] sm:$0x1] 0.0
    %26 = vst [vmem:[#allocation4] sm:$0x1] 0.0
    %27 = vst [vmem:[#allocation5] sm:$0x1] 0.0
  $region25: #{custom_loss.1} parent=0 // pred_fallthru
    _
  %v28 = vld [vmem:[%s0] sm:$0xf]
  %vm29 = vcmask 1043456
  %v30 = vsel %vm29, %v28, 0.0
  %v31 = vrot.slane %v30, 4
  %v32 = vadd.f32 %v30, %v31
  %v33 = vrot.slane %v32, 2
  %v34 = vadd.f32 %v32, %v33
  %v35 = vrot.slane %v34, 1
  %v36 = vadd.f32 %v34, %v35
  %v37 = vmul.f32 %v36, 0.25
  %v38 = vld [vmem:[%s1] sm:$0xf]
  %v39 = vsel %vm29, %v38, 0.0
  %v40 = vrot.slane %v39, 4
  %v41 = vadd.f32 %v39, %v40
  %v42 = vrot.slane %v41, 2
  %v43 = vadd.f32 %v41, %v42
  %v44 = vrot.slane %v43, 1
  %v45 = vadd.f32 %v43, %v44
  %v46 = vmul.f32 %v45, 0.25
  %v47 = vld [vmem:[%s3] sm:$0x1]
  %v48 = vld [vmem:[%s2] sm:$0x1]
  %vm49 = vcmp.eq.s32.totalorder %v47, 3
  %v50 = vsel %vm49, 1, 0
  %v51 = vcvt.s32.f32 %v50
  %vm52 = vcmp.ge.s32.totalorder %v47, 0
  %v53 = vsel %vm52, 1, 0
  %v54 = vcvt.s32.f32 %v53
  %v55 = vsub.f32 %v54, %v51
  %v56 = vmax.f32 %v37, %v46
  %v57 = vsub.f32 %v37, %v46
  %v58 = vand.u32 2147483647, %v57
  %v59 = vsub.f32 0.0, %v58
  %v60 = vmul.f32 %v59, 1.442695
  %v61 = vpow.pop %v60
  %v62 = vadd.f32 %v61, 1.0
  %v63 = vlog2.pop %v62
  %v64 = vmul.f32 %v63, 0.6931472
  %v65 = vadd.f32 %v56, %v64
  %vm66 = vcmp.eq.s32.totalorder %v48, 0
  %v67 = vsel %vm66, %v37, %v46
  %v68 = vld [vmem:[#allocation2] sm:$0x1]
  %v69 = vsub.f32 %v65, %v67
  %v70 = vmul.f32 %v51, %v69
  %v71 = vadd.f32 %v68, %v70
  %72 = vst [vmem:[#allocation2] sm:$0x1] %v71
  %v73 = vld [vmem:[#allocation3] sm:$0x1]
  %v74 = vadd.f32 %v73, %v51
  %75 = vst [vmem:[#allocation3] sm:$0x1] %v74
  %v76 = vld [vmem:[#allocation4] sm:$0x1]
  %v77 = vsub.f32 %v37, 0.5
  %v78 = vmul.f32 %v77, %v77
  %v79 = vsub.f32 %v46, 0.5
  %v80 = vmul.f32 %v79, %v79
  %v81 = vadd.f32 %v78, %v80
  %v82 = vmul.f32 %v55, %v81
  %v83 = vadd.f32 %v76, %v82
  %84 = vst [vmem:[#allocation4] sm:$0x1] %v83
  %v85 = vld [vmem:[#allocation5] sm:$0x1]
  %v86 = vadd.f32 %v85, %v55
  %87 = vst [vmem:[#allocation5] sm:$0x1] %v86
  // Predicated region
  $region26: #{custom_loss.1} parent=0 // pred_check
    %p88 = pneg %p20
  $region27: #{custom_loss.1} parent=0 // pred_check_branch
    %90 = sbr.rel (%p88) target = $region29
  $region28: #{custom_loss.1} parent=0 // pred_region
    %v91 = vld [vmem:[#allocation2] sm:$0x1]
    %vm92 = vcmask 1040384
    %v93 = vsel %vm92, %v91, 0.0
    %94 = vadd.xlane.f32.xlu0 %v93
    %v95 = vpop.xlane.xlu0 %94
    %v96 = vrot.slane %v95, 4
    %v97 = vadd.f32 %v95, %v96
    %v98 = vrot.slane %v97, 2
    %v99 = vadd.f32 %v97, %v98
    %v100 = vrot.slane %v99, 1
    %v101 = vadd.f32 %v99, %v100
    %s102 = vtos %v101
    %v103 = vstv %s102
    %v104 = vld [vmem:[#allocation3] sm:$0x1]
    %v105 = vsel %vm92, %v104, 0.0
    %106 = vadd.xlane.f32.xlu0 %v105
    %v107 = vpop.xlane.xlu0 %106
    %v108 = vrot.slane %v107, 4
    %v109 = vadd.f32 %v107, %v108
    %v110 = vrot.slane %v109, 2
    %v111 = vadd.f32 %v109, %v110
    %v112 = vrot.slane %v111, 1
    %v113 = vadd.f32 %v111, %v112
    %s114 = vtos %v113
    %v115 = vstv %s114
    %v116 = vld [vmem:[#allocation4] sm:$0x1]
    %v117 = vsel %vm92, %v116, 0.0
    %118 = vadd.xlane.f32.xlu0 %v117
    %v119 = vpop.xlane.xlu0 %118
    %v120 = vrot.slane %v119, 4
    %v121 = vadd.f32 %v119, %v120
    %v122 = vrot.slane %v121, 2
    %v123 = vadd.f32 %v121, %v122
    %v124 = vrot.slane %v123, 1
    %v125 = vadd.f32 %v123, %v124
    %s126 = vtos %v125
    %v127 = vstv %s126
    %v128 = vld [vmem:[#allocation5] sm:$0x1]
    %v129 = vsel %vm92, %v128, 0.0
    %130 = vadd.xlane.f32.xlu0 %v129
    %v131 = vpop.xlane.xlu0 %130
    %v132 = vrot.slane %v131, 4
    %v133 = vadd.f32 %v131, %v132
    %v134 = vrot.slane %v133, 2
    %v135 = vadd.f32 %v133, %v134
    %v136 = vrot.slane %v135, 1
    %v137 = vadd.f32 %v135, %v136
    %s138 = vtos %v137
    %v139 = vstv %s138
    %v140 = vrcp.pop %v115
    %v141 = vmul.f32 %v103, %v140
    %v142 = vmul.f32 %v139, 2.0
    %v143 = vrcp.pop %v142
    %v144 = vmul.f32 %v127, %v143
    %v145 = vmul.f32 %v144, 0.01
    %v146 = vadd.f32 %v141, %v145
    %v147 = vld [vmem:[%s4] sm:$0x1]
    %v148 = vsub.f32 %v147, 0.01
    %v149 = vmul.f32 %v148, %v148
    %vm150 = vcmask 253952
    %v151 = vsel %vm150, %v149, 0.0
    %152 = vadd.xlane.f32.xlu0 %v151
    %v153 = vpop.xlane.xlu0 %152
    %v154 = vrot.slane %v153, 4
    %v155 = vadd.f32 %v153, %v154
    %v156 = vrot.slane %v155, 2
    %v157 = vadd.f32 %v155, %v156
    %v158 = vrot.slane %v157, 1
    %v159 = vadd.f32 %v157, %v158
    %s160 = vtos %v159
    %v161 = vstv %s160
    %v162 = vmul.f32 %v161, 300.0
    %v163 = vlaneseq
    %v164 = vand.u32 %v163, 127
    %vm165 = vcmp.eq.s32.totalorder %v164, 0
    %vm166 = vcmp.eq.s32.totalorder %v164, 1
    %vm167 = vcmp.eq.s32.totalorder %v164, 2
    %v168 = vsel %vm167, %v141, 300.0
    %v169 = vsel %vm166, %v162, %v168
    %v170 = vsel %vm165, %v146, %v169
    %171 = vst [vmem:[%s5] sm:$0x1] %v170
  $region29: #{custom_loss.1} parent=0 // pred_fallthru
    _
  // Predicated region
  $region30: #{custom_loss.1} parent=0 // pred_check
    _
  $region31: #{custom_loss.1} parent=0 // pred_check_branch
    %173 = sbr.rel (0) target = $region33
  $region32: #{custom_loss.1} parent=0 // pred_region
    _
  $region33: #{custom_loss.1} parent=0 // pred_fallthru
    _
  // Predicated region
  $region34: #{custom_loss.1} parent=0 // pred_check
    _
  $region35: #{custom_loss.1} parent=0 // pred_check_branch
    %175 = sbr.rel (0) target = $region37
  $region36: #{custom_loss.1} parent=0 // pred_region
    _
  $region37: #{custom_loss.1} parent=0 // pred_fallthru
    _

</llo_original>
